<compile_context>
chip_gen: v7x
topology: tpu7x:2x2x1
jax: 0.10.0
libtpu: 0.0.40
codegen_flags: <defaults>
</compile_context>

<pallas_src>
import numpy as np
import jax
import jax.numpy as jnp
from jax.experimental import pallas as pl
from jax.experimental.pallas import tpu as pltpu

# ---- tiny EVA-02-ish config (synthetic stand-in for eva02_large_patch14_448) ----
IMG_SIZE = 28       # stands in for 448
PATCH = 14          # patch14 (kept)
IN_CH = 3
EMBED = 32          # stands in for 1024
DEPTH = 2           # stands in for 24
HEADS = 4
HEAD_DIM = EMBED // HEADS
MLP_HIDDEN = 64
NUM_PATCHES = (IMG_SIZE // PATCH) ** 2
TOKENS = NUM_PATCHES + 1  # + cls token
EPS = 1e-6
ATTN_SCALE = 1.0 / float(np.sqrt(HEAD_DIM))
NEG_INF = -1e30

_vmem = pl.BlockSpec(memory_space=pltpu.MemorySpace.VMEM)


def _call(kernel, n_in, out_shape):
    # All shapes are tiny -> full-array blocks resident in VMEM, no grid.
    return pl.pallas_call(
        kernel,
        in_specs=[_vmem] * n_in,
        out_specs=_vmem,
        out_shape=out_shape,
    )


# --------------------------- in-kernel helpers ---------------------------

def _ln(x, g, b):
    # f32 layernorm over the lane (feature) axis.
    mu = jnp.mean(x, axis=-1, keepdims=True)
    var = jnp.mean(jnp.square(x - mu), axis=-1, keepdims=True)
    return (x - mu) * jax.lax.rsqrt(var + EPS) * g + b


def _mm(a, b):
    # bf16 MXU matmul with f32 accumulation.
    return jnp.dot(a.astype(jnp.bfloat16), b.astype(jnp.bfloat16),
                   preferred_element_type=jnp.float32)


# ------------------------- fused patch-embed kernel -------------------------

def _embed_kernel(p_ref, w_ref, b_ref, scat_ref, clsind_ref, cls_ref, pos_ref,
                  o_ref):
    # p_ref:    (B*NP, C*ph*pw) flattened patches
    # scat_ref: (B*T, B*NP) exact 0/1 placement matrix (patch tokens -> token rows)
    # clsind:   (B*T, 1) indicator of cls rows; cls: (1, D); pos: (B*T, D)
    pe = _mm(p_ref[...], w_ref[...]) + b_ref[...]                      # (B*NP, D) f32
    x = jnp.dot(scat_ref[...], pe, preferred_element_type=jnp.float32)  # place tokens
    x = x + clsind_ref[...] * cls_ref[...] + pos_ref[...]
    o_ref[...] = x.astype(o_ref.dtype)


def fused_embed(patches2d, w, b, scat, cls_ind, cls, pos_full, bsz):
    return _call(_embed_kernel, 7,
                 jax.ShapeDtypeStruct((bsz * TOKENS, EMBED), jnp.float32))(
        patches2d, w, b, scat, cls_ind, cls, pos_full)


# ----------------------- fused transformer-block kernel -----------------------

def _block_kernel(x_ref, bias_ref,
                  ln1_g_ref, ln1_b_ref,
                  q_w_ref, q_b_ref, k_w_ref, k_b_ref, v_w_ref, v_b_ref,
                  proj_w_ref, proj_b_ref,
                  ln2_g_ref, ln2_b_ref,
                  w1_ref, b1_ref, w2_ref, b2_ref, w3_ref, b3_ref,
                  o_ref):
    x = x_ref[...].astype(jnp.float32)          # (B*T, D)
    attn_bias = bias_ref[...]                   # (B*T, B*T): 0 same-image, -1e30 cross

    # ---- attention sub-block (pre-norm) ----
    h = _ln(x, ln1_g_ref[...], ln1_b_ref[...])
    hb = h.astype(jnp.bfloat16)
    q_all = (jnp.dot(hb, q_w_ref[...], preferred_element_type=jnp.float32)
             + q_b_ref[...]) * ATTN_SCALE       # scale folded into q once
    k_all = jnp.dot(hb, k_w_ref[...], preferred_element_type=jnp.float32) + k_b_ref[...]
    v_all = jnp.dot(hb, v_w_ref[...], preferred_element_type=jnp.float32) + v_b_ref[...]
    kb = k_all.astype(jnp.bfloat16)             # hoisted out of the head loop
    vb = v_all.astype(jnp.bfloat16)

    # Per-head attention via lane masks: avoids narrow (hd=8) layouts / slices
    # while staying exact (masked-out q lanes contribute exact zeros).
    lane = jax.lax.broadcasted_iota(jnp.int32, (1, EMBED), 1)
    attn_out = jnp.zeros_like(q_all)
    for hd in range(HEADS):
        m = jnp.where((lane >= hd * HEAD_DIM) & (lane < (hd + 1) * HEAD_DIM),
                      1.0, 0.0)
        q = (q_all * m).astype(jnp.bfloat16)
        s = jax.lax.dot_general(q, kb, (((1,), (1,)), ((), ())),
                                preferred_element_type=jnp.float32)
        s = s + attn_bias
        s = s - jnp.max(s, axis=-1, keepdims=True)
        p = jnp.exp(s)
        p = p * pl.reciprocal(jnp.sum(p, axis=-1, keepdims=True), approx=True)
        o_h = jnp.dot(p.astype(jnp.bfloat16), vb,
                      preferred_element_type=jnp.float32)
        attn_out = attn_out + o_h * m
    o = _mm(attn_out, proj_w_ref[...]) + proj_b_ref[...]
    x = x + o

    # ---- SwiGLU MLP sub-block (pre-norm) ----
    h2 = _ln(x, ln2_g_ref[...], ln2_b_ref[...])
    a = _mm(h2, w1_ref[...]) + b1_ref[...]
    g = _mm(h2, w2_ref[...]) + b2_ref[...]
    mlp = (a * jax.nn.sigmoid(a)) * g           # SiLU gate in f32
    mlp = _mm(mlp, w3_ref[...]) + b3_ref[...]
    o_ref[...] = (x + mlp).astype(o_ref.dtype)


def fused_block(x, attn_bias, blk):
    return _call(_block_kernel, 20,
                 jax.ShapeDtypeStruct(x.shape, x.dtype))(
        x, attn_bias,
        blk['ln1_g'], blk['ln1_b'],
        blk['q_w'], blk['q_b'], blk['k_w'], blk['k_b'], blk['v_w'], blk['v_b'],
        blk['proj_w'], blk['proj_b'],
        blk['ln2_g'], blk['ln2_b'],
        blk['mlp_w1'], blk['mlp_b1'], blk['mlp_w2'], blk['mlp_b2'],
        blk['mlp_w3'], blk['mlp_b3'])


# ----------------------- fused avg-pool + fc_norm kernel -----------------------

def _pool_norm_kernel(x_ref, pm_ref, g_ref, b_ref, o_ref):
    # pm_ref: (B, B*T) pooling matrix (1/NUM_PATCHES over patch tokens, 0 for cls).
    x = x_ref[...].astype(jnp.float32)
    pooled = jnp.dot(pm_ref[...], x, preferred_element_type=jnp.float32)   # (B, D)
    o_ref[...] = _ln(pooled, g_ref[...], b_ref[...]).astype(o_ref.dtype)


def fused_pool_norm(x, pool_mat, g, b, bsz):
    return _call(_pool_norm_kernel, 4,
                 jax.ShapeDtypeStruct((bsz, EMBED), jnp.float32))(
        x, pool_mat, g, b)


# --------------------------- host-side constants ---------------------------

def _attn_bias(bsz):
    img = np.arange(bsz * TOKENS) // TOKENS
    same = img[:, None] == img[None, :]
    return jnp.asarray(np.where(same, 0.0, NEG_INF).astype(np.float32))


def _pool_matrix(bsz):
    m = np.zeros((bsz, bsz * TOKENS), np.float32)
    for b in range(bsz):
        m[b, b * TOKENS + 1:(b + 1) * TOKENS] = 1.0 / NUM_PATCHES
    return jnp.asarray(m)


def _scatter_matrix(bsz):
    s = np.zeros((bsz * TOKENS, bsz * NUM_PATCHES), np.float32)
    for b in range(bsz):
        for n in range(NUM_PATCHES):
            s[b * TOKENS + 1 + n, b * NUM_PATCHES + n] = 1.0
    return jnp.asarray(s)


def _cls_indicator(bsz):
    c = np.zeros((bsz * TOKENS, 1), np.float32)
    c[::TOKENS, 0] = 1.0
    return jnp.asarray(c)


# --------------------------- parameters (deterministic) ---------------------------

def init_params(key):
    keys = jax.random.split(key, 128)
    ki = iter(keys)

    def w(shape, scale=0.02):
        # matmul weights stored in bf16 (MXU-native); accumulation stays f32.
        return (scale * jax.random.normal(next(ki), shape)).astype(jnp.bfloat16)

    def wf32(shape, scale=0.02):
        return (scale * jax.random.normal(next(ki), shape)).astype(jnp.float32)

    def zeros(shape): return jnp.zeros(shape, jnp.float32)
    def ones(shape): return jnp.ones(shape, jnp.float32)

    P = IN_CH * PATCH * PATCH
    params = {
        'patch_w': w((P, EMBED)),                 # patch-embed conv as matmul
        'patch_b': zeros((1, EMBED)),
        'cls': wf32((1, EMBED)),
        'pos': wf32((TOKENS, EMBED)),
        'fc_norm_g': ones((1, EMBED)),
        'fc_norm_b': zeros((1, EMBED)),
        # Defined as in the PyTorch module's __init__; not used in forward().
        'logit_scale': jnp.asarray(np.log(1.0 / 0.07), jnp.float32),
        'blocks': [],
    }
    for _ in range(DEPTH):
        params['blocks'].append({
            'ln1_g': ones((1, EMBED)), 'ln1_b': zeros((1, EMBED)),
            'q_w': w((EMBED, EMBED)), 'q_b': zeros((1, EMBED)),
            'k_w': w((EMBED, EMBED)), 'k_b': zeros((1, EMBED)),
            'v_w': w((EMBED, EMBED)), 'v_b': zeros((1, EMBED)),
            'proj_w': w((EMBED, EMBED)), 'proj_b': zeros((1, EMBED)),
            'ln2_g': ones((1, EMBED)), 'ln2_b': zeros((1, EMBED)),
            'mlp_w1': w((EMBED, MLP_HIDDEN)), 'mlp_b1': zeros((1, MLP_HIDDEN)),
            'mlp_w2': w((EMBED, MLP_HIDDEN)), 'mlp_b2': zeros((1, MLP_HIDDEN)),
            'mlp_w3': w((MLP_HIDDEN, EMBED)), 'mlp_b3': zeros((1, EMBED)),
        })
    return params


# --------------------------- forward (glue in plain JAX) ---------------------------

def patchify(img):
    # (B, C, H, W) -> (B*num_patches, C*ph*pw); same element order as a
    # stride=kernel conv flattening (D, C, ph, pw) weights.
    b, c, h, wd = img.shape
    hp, wp = h // PATCH, wd // PATCH
    x = img.reshape(b, c, hp, PATCH, wp, PATCH)
    x = x.transpose(0, 2, 4, 1, 3, 5)  # (B, Hp, Wp, C, ph, pw)
    return x.reshape(b * hp * wp, c * PATCH * PATCH)


def backbone(params, images):
    b = images.shape[0]
    patches = patchify(images)                          # (B*NP, P)
    pos_full = jnp.tile(params['pos'], (b, 1))          # (B*T, D)

    # fused patch-embed + cls insert + pos add -> (B*T, D) token-major activations
    x = fused_embed(patches, params['patch_w'], params['patch_b'],
                    _scatter_matrix(b), _cls_indicator(b), params['cls'],
                    pos_full, b)

    attn_bias = _attn_bias(b)
    for blk in params['blocks']:
        x = fused_block(x, attn_bias, blk)              # one pallas_call per block

    # num_classes=0 in timm -> pooled features (avg pool over patch tokens + fc_norm)
    return fused_pool_norm(x, _pool_matrix(b),
                           params['fc_norm_g'], params['fc_norm_b'], b)


def timm_model_forward(params, img1, img2=None):
    """Mirrors TimmModel.forward: concat -> backbone -> split."""
    if img2 is not None:
        images = jnp.concatenate([img1, img2], axis=0)
        feats = backbone(params, images)
        n1 = img1.shape[0]
        return feats[:n1, :], feats[n1:, :]
    return backbone(params, img1)


if __name__ == "__main__":
    key = jax.random.PRNGKey(0)
    kp, k1, k2 = jax.random.split(key, 3)
    params = init_params(kp)

    img1 = jax.random.normal(k1, (2, IN_CH, IMG_SIZE, IMG_SIZE), jnp.float32)
    img2 = jax.random.normal(k2, (2, IN_CH, IMG_SIZE, IMG_SIZE), jnp.float32)

    # two-image path (contrastive pair), as in the PyTorch forward
    f1, f2 = timm_model_forward(params, img1, img2)
    jax.block_until_ready((f1, f2))
    assert f1.shape == (2, EMBED) and f2.shape == (2, EMBED)

    # single-image path must match the first half of the batched path
    f_single = timm_model_forward(params, img1)
    jax.block_until_ready(f_single)
    assert f_single.shape == (2, EMBED)
    assert jnp.allclose(f_single, f1, atol=1e-4)

    print("KERNEL_OK")
</pallas_src>

<mosaic_0001>
module attributes {stable_mosaic.version = 11 : i64} {
  func.func @_embed_kernel(%arg0: memref<16x588xf32, #tpu.memory_space<vmem>>, %arg1: memref<588x32xbf16, #tpu.memory_space<vmem>>, %arg2: memref<1x32xf32, #tpu.memory_space<vmem>>, %arg3: memref<20x16xf32, #tpu.memory_space<vmem>>, %arg4: memref<20x1xf32, #tpu.memory_space<vmem>>, %arg5: memref<1x32xf32, #tpu.memory_space<vmem>>, %arg6: memref<20x32xf32, #tpu.memory_space<vmem>>, %arg7: memref<20x32xf32, #tpu.memory_space<vmem>>) attributes {dimension_semantics = [], scalar_prefetch = 0 : i64, scratch_operands = 0 : i64, tpu.core_type = #tpu.core_type<tc>} {
    %c0 = arith.constant 0 : index
    %c0_0 = arith.constant 0 : index
    %0 = vector.load %arg0[%c0, %c0_0] : memref<16x588xf32, #tpu.memory_space<vmem>>, vector<16x588xf32>
    %c0_1 = arith.constant 0 : index
    %c0_2 = arith.constant 0 : index
    %1 = vector.load %arg1[%c0_1, %c0_2] : memref<588x32xbf16, #tpu.memory_space<vmem>>, vector<588x32xbf16>
    %2 = arith.truncf %0 : vector<16x588xf32> to vector<16x588xbf16>
    %cst = arith.constant dense<0.000000e+00> : vector<16x32xf32>
    %3 = tpu.matmul %2, %1, %cst {dimension_numbers = #tpu.dot_dimension_numbers<[1], [0], [0], [1], [0, 0, 1, 1], [], []>} : vector<16x588xbf16>, vector<588x32xbf16>, vector<16x32xf32> -> vector<16x32xf32>
    %c0_3 = arith.constant 0 : index
    %c0_4 = arith.constant 0 : index
    %4 = vector.load %arg2[%c0_3, %c0_4] : memref<1x32xf32, #tpu.memory_space<vmem>>, vector<1x32xf32>
    %5 = vector.broadcast %4 : vector<1x32xf32> to vector<16x32xf32>
    %6 = arith.addf %3, %5 : vector<16x32xf32>
    %c0_5 = arith.constant 0 : index
    %c0_6 = arith.constant 0 : index
    %7 = vector.load %arg3[%c0_5, %c0_6] : memref<20x16xf32, #tpu.memory_space<vmem>>, vector<20x16xf32>
    %cst_7 = arith.constant dense<0.000000e+00> : vector<20x32xf32>
    %8 = tpu.matmul %7, %6, %cst_7 {dimension_numbers = #tpu.dot_dimension_numbers<[1], [0], [0], [1], [0, 0, 1, 1], [], []>} : vector<20x16xf32>, vector<16x32xf32>, vector<20x32xf32> -> vector<20x32xf32>
    %c0_8 = arith.constant 0 : index
    %c0_9 = arith.constant 0 : index
    %9 = vector.load %arg4[%c0_8, %c0_9] : memref<20x1xf32, #tpu.memory_space<vmem>>, vector<20x1xf32>
    %c0_10 = arith.constant 0 : index
    %c0_11 = arith.constant 0 : index
    %10 = vector.load %arg5[%c0_10, %c0_11] : memref<1x32xf32, #tpu.memory_space<vmem>>, vector<1x32xf32>
    %11 = vector.broadcast %9 : vector<20x1xf32> to vector<20x32xf32>
    %12 = vector.broadcast %10 : vector<1x32xf32> to vector<20x32xf32>
    %13 = arith.mulf %11, %12 : vector<20x32xf32>
    %14 = arith.addf %8, %13 : vector<20x32xf32>
    %c0_12 = arith.constant 0 : index
    %c0_13 = arith.constant 0 : index
    %15 = vector.load %arg6[%c0_12, %c0_13] : memref<20x32xf32, #tpu.memory_space<vmem>>, vector<20x32xf32>
    %16 = arith.addf %14, %15 : vector<20x32xf32>
    %c0_14 = arith.constant 0 : index
    %c0_15 = arith.constant 0 : index
    %17 = vector.load %arg7[%c0_14, %c0_15] : memref<20x32xf32, #tpu.memory_space<vmem>>, vector<20x32xf32>
    tpu.vector_store %arg7[%c0_14, %c0_15], %16 {strides = array<i32>} : memref<20x32xf32, #tpu.memory_space<vmem>>, vector<20x32xf32>,
    return
  }
}

</mosaic_0001>

<llo_original>
// kernel: tpu_custom_call.1
$region0: #{tpu_custom_call.1}
  #allocation0 [shape = 'u32[]', space=smem, size = 0x4, offset = 0x4, fixed_abs, tag = 'smem constant byte address 0x4 - core index']
  #allocation1 [shape = 'u32[144,128]{1,0:T(1,128)}', space=vmem, size = 0x12000, scoped, tag = 'internal scratch']
  %s0 = inlined_call_operand.vmem [shape: f32[16,588], index: 0, kind: input, shape index: {}]
  %s1 = inlined_call_operand.vmem [shape: bf16[588,32], index: 1, kind: input, shape index: {}]
  %s2 = inlined_call_operand.vmem [shape: f32[1,32], index: 2, kind: input, shape index: {}]
  %s3 = inlined_call_operand.vmem [shape: f32[20,16], index: 3, kind: input, shape index: {}]
  %s4 = inlined_call_operand.vmem [shape: f32[20,1], index: 4, kind: input, shape index: {}]
  %s5 = inlined_call_operand.vmem [shape: f32[1,32], index: 5, kind: input, shape index: {}]
  %s6 = inlined_call_operand.vmem [shape: f32[20,32], index: 6, kind: input, shape index: {}]
  %s7 = inlined_call_operand.hbm [shape: f32[20,32], index: 7, kind: output, shape index: {}]
  %s8 = sld [smem:[#allocation0]]
  $region38: #{tpu_custom_call.1} parent=0
    _
  %s10 = ssub.s32 1, %s8
  %s11 = scalar_select 0, %s10, %s8
  $region1: #{tpu_custom_call.1} parent=0
    #allocation2 [shape = 'u8[12288]{0}', space=vmem, size = 0x3000, scoped, tag = 'output window, operand 0, single buffered']
    #allocation3 [shape = 's32[1]{0}', space=sflag, size = 0x4, scoped, tag = 'scoped memory for tpu_custom_call.1']
    %12 = vsyncpa [#allocation3], 0
    // Predicated region
    $region2: #{tpu_custom_call.1} parent=1 // pred_check
      _
    $region3: #{tpu_custom_call.1} parent=1 // pred_check_branch
      %14 = sbr.rel (0) target = $region5
    $region4: #{tpu_custom_call.1} parent=1 // pred_region
      _
    $region5: #{tpu_custom_call.1} parent=1 // pred_fallthru
      _
    // Predicated region
    $region6: #{tpu_custom_call.1} parent=1 // pred_check
      _
    $region7: #{tpu_custom_call.1} parent=1 // pred_check_branch
      %16 = sbr.rel (0) target = $region9
    $region8: #{tpu_custom_call.1} parent=1 // pred_region
      _
    $region9: #{tpu_custom_call.1} parent=1 // pred_fallthru
      _
    // Predicated region
    $region10: #{tpu_custom_call.1} parent=1 // pred_check
      _
    $region11: #{tpu_custom_call.1} parent=1 // pred_check_branch
      %18 = sbr.rel (0) target = $region13
    $region12: #{tpu_custom_call.1} parent=1 // pred_region
      _
    $region13: #{tpu_custom_call.1} parent=1 // pred_fallthru
      _
    // Predicated region
    $region14: #{tpu_custom_call.1} parent=1 // pred_check
      _
    $region15: #{tpu_custom_call.1} parent=1 // pred_check_branch
      %20 = sbr.rel (0) target = $region17
    $region16: #{tpu_custom_call.1} parent=1 // pred_region
      _
    $region17: #{tpu_custom_call.1} parent=1 // pred_fallthru
      _
    // Predicated region
    $region18: #{tpu_custom_call.1} parent=1 // pred_check
      _
    $region19: #{tpu_custom_call.1} parent=1 // pred_check_branch
      %22 = sbr.rel (0) target = $region21
    $region20: #{tpu_custom_call.1} parent=1 // pred_region
      _
    $region21: #{tpu_custom_call.1} parent=1 // pred_fallthru
      _
    // Predicated region
    $region22: #{tpu_custom_call.1} parent=1 // pred_check
      _
    $region23: #{tpu_custom_call.1} parent=1 // pred_check_branch
      %24 = sbr.rel (0) target = $region25
    $region24: #{tpu_custom_call.1} parent=1 // pred_region
      _
    $region25: #{tpu_custom_call.1} parent=1 // pred_fallthru
      _
    // Predicated region
    $region26: #{tpu_custom_call.1} parent=1 // pred_check
      _
    $region27: #{tpu_custom_call.1} parent=1 // pred_check_branch
      %26 = sbr.rel (0) target = $region29
    $region28: #{tpu_custom_call.1} parent=1 // pred_region
      _
    $region29: #{tpu_custom_call.1} parent=1 // pred_fallthru
      _
    %v28 = vld [vmem:[%s0] sm:$0xff]
    %v29 = vld [vmem:[%s0 + $0x8] sm:$0xff]
    %v30 = vld [vmem:[%s0 + $0x10] sm:$0xff]
    %v31 = vld [vmem:[%s0 + $0x18] sm:$0xff]
    %v32 = vld [vmem:[%s0 + $0x20] sm:$0xff]
    %v33 = vld [vmem:[%s0 + $0x28] sm:$0xff]
    %v34 = vld [vmem:[%s0 + $0x30] sm:$0xff]
    %v35 = vld [vmem:[%s0 + $0x38] sm:$0xff]
    %v36 = vld [vmem:[%s0 + $0x40] sm:$0xff]
    %v37 = vld [vmem:[%s0 + $0x48] sm:$0xff]
    %v38 = vld [vmem:[%s1] sm:$0xf]
    %v39 = vld [vmem:[%s1 + $0x4] sm:$0xf]
    %v40 = vld [vmem:[%s1 + $0x8] sm:$0xf]
    %v41 = vld [vmem:[%s1 + $0xc] sm:$0xf]
    %v42 = vld [vmem:[%s1 + $0x10] sm:$0xf]
    %v43 = vld [vmem:[%s1 + $0x14] sm:$0xf]
    %v44 = vld [vmem:[%s1 + $0x18] sm:$0xf]
    %v45 = vld [vmem:[%s1 + $0x1c] sm:$0xf]
    %v46 = vld [vmem:[%s1 + $0x20] sm:$0xf]
    %v47 = vld [vmem:[%s1 + $0x24] sm:$0xf]
    %v48 = vld [vmem:[%s1 + $0x28] sm:$0xf]
    %v49 = vld [vmem:[%s1 + $0x2c] sm:$0xf]
    %v50 = vld [vmem:[%s1 + $0x30] sm:$0xf]
    %v51 = vld [vmem:[%s1 + $0x34] sm:$0xf]
    %v52 = vld [vmem:[%s1 + $0x38] sm:$0xf]
    %v53 = vld [vmem:[%s1 + $0x3c] sm:$0xf]
    %v54 = vld [vmem:[%s1 + $0x40] sm:$0xf]
    %v55 = vld [vmem:[%s1 + $0x44] sm:$0xf]
    %v56 = vld [vmem:[%s1 + $0x48] sm:$0xf]
    %v57 = vld [vmem:[%s1 + $0x4c] sm:$0xf]
    %v58 = vld [vmem:[%s1 + $0x50] sm:$0xf]
    %v59 = vld [vmem:[%s1 + $0x54] sm:$0xf]
    %v60 = vld [vmem:[%s1 + $0x58] sm:$0xf]
    %v61 = vld [vmem:[%s1 + $0x5c] sm:$0xf]
    %v62 = vld [vmem:[%s1 + $0x60] sm:$0xf]
    %v63 = vld [vmem:[%s1 + $0x64] sm:$0xf]
    %v64 = vld [vmem:[%s1 + $0x68] sm:$0xf]
    %v65 = vld [vmem:[%s1 + $0x6c] sm:$0xf]
    %v66 = vld [vmem:[%s1 + $0x70] sm:$0xf]
    %v67 = vld [vmem:[%s1 + $0x74] sm:$0xf]
    %v68 = vld [vmem:[%s1 + $0x78] sm:$0xf]
    %v69 = vld [vmem:[%s1 + $0x7c] sm:$0xf]
    %v70 = vld [vmem:[%s1 + $0x80] sm:$0xf]
    %v71 = vld [vmem:[%s1 + $0x84] sm:$0xf]
    %v72 = vld [vmem:[%s1 + $0x88] sm:$0xf]
    %v73 = vld [vmem:[%s1 + $0x8c] sm:$0xf]
    %v74 = vld [vmem:[%s1 + $0x90] sm:$0xf]
    %v75 = vld [vmem:[%s1 + $0x94] sm:$0xf]
    %v76 = vld [vmem:[%s1 + $0x98] sm:$0xf]
    %v77 = vld [vmem:[%s1 + $0x9c] sm:$0xf]
    %v78 = vld [vmem:[%s1 + $0xa0] sm:$0xf]
    %v79 = vld [vmem:[%s1 + $0xa4] sm:$0xf]
    %v80 = vld [vmem:[%s1 + $0xa8] sm:$0xf]
    %v81 = vld [vmem:[%s1 + $0xac] sm:$0xf]
    %v82 = vld [vmem:[%s1 + $0xb0] sm:$0xf]
    %v83 = vld [vmem:[%s1 + $0xb4] sm:$0xf]
    %v84 = vld [vmem:[%s1 + $0xb8] sm:$0xf]
    %v85 = vld [vmem:[%s1 + $0xbc] sm:$0xf]
    %v86 = vld [vmem:[%s1 + $0xc0] sm:$0xf]
    %v87 = vld [vmem:[%s1 + $0xc4] sm:$0xf]
    %v88 = vld [vmem:[%s1 + $0xc8] sm:$0xf]
    %v89 = vld [vmem:[%s1 + $0xcc] sm:$0xf]
    %v90 = vld [vmem:[%s1 + $0xd0] sm:$0xf]
    %v91 = vld [vmem:[%s1 + $0xd4] sm:$0xf]
    %v92 = vld [vmem:[%s1 + $0xd8] sm:$0xf]
    %v93 = vld [vmem:[%s1 + $0xdc] sm:$0xf]
    %v94 = vld [vmem:[%s1 + $0xe0] sm:$0xf]
    %v95 = vld [vmem:[%s1 + $0xe4] sm:$0xf]
    %v96 = vld [vmem:[%s1 + $0xe8] sm:$0xf]
    %v97 = vld [vmem:[%s1 + $0xec] sm:$0xf]
    %v98 = vld [vmem:[%s1 + $0xf0] sm:$0xf]
    %v99 = vld [vmem:[%s1 + $0xf4] sm:$0xf]
    %v100 = vld [vmem:[%s1 + $0xf8] sm:$0xf]
    %v101 = vld [vmem:[%s1 + $0xfc] sm:$0xf]
    %v102 = vld [vmem:[%s1 + $0x100] sm:$0xf]
    %v103 = vld [vmem:[%s1 + $0x104] sm:$0xf]
    %v104 = vld [vmem:[%s1 + $0x108] sm:$0xf]
    %v105 = vld [vmem:[%s1 + $0x10c] sm:$0xf]
    %v106 = vld [vmem:[%s1 + $0x110] sm:$0xf]
    %v107 = vld [vmem:[%s1 + $0x114] sm:$0xf]
    %v108 = vld [vmem:[%s1 + $0x118] sm:$0xf]
    %v109 = vld [vmem:[%s1 + $0x11c] sm:$0xf]
    %v110 = vld [vmem:[%s1 + $0x120] sm:$0xf]
    %v111 = vld [vmem:[%s1 + $0x124] sm:$0x3]
    %v112 = vpack.c.bf16 %v33, %v28
    %v113 = vpack.c.bf16 %v34, %v29
    %v114 = vpack.c.bf16 %v35, %v30
    %v115 = vpack.c.bf16 %v36, %v31
    %v116 = vpack.c.bf16 %v37, %v32
    %v117 = vld [vmem:[%s2] sm:$0x1]
    %v119 = vlaneseq
    %v120 = vshrl.u32 %v119, 7
    %v121 = vsub.s32 0, %v120
    %v122 = vrot.slane %v117, %v121
    %v198 = vunpack.c.l.b16 %v38
    %v199 = vunpack.c.l.b16 %v39
    %v200 = vunpack.c.l.b16 %v40
    %v201 = vunpack.c.l.b16 %v41
    %v202 = vunpack.c.l.b16 %v42
    %v203 = vunpack.c.l.b16 %v43
    %v204 = vunpack.c.l.b16 %v44
    %v205 = vunpack.c.l.b16 %v45
    %v206 = vunpack.c.l.b16 %v46
    %v207 = vunpack.c.l.b16 %v47
    %v208 = vunpack.c.l.b16 %v48
    %v209 = vunpack.c.l.b16 %v49
    %v210 = vunpack.c.l.b16 %v50
    %v211 = vunpack.c.l.b16 %v51
    %v212 = vunpack.c.l.b16 %v52
    %v213 = vunpack.c.l.b16 %v53
    %v214 = vunpack.c.l.b16 %v54
    %v215 = vunpack.c.l.b16 %v55
    %v216 = vunpack.c.l.b16 %v56
    %v217 = vunpack.c.l.b16 %v57
    %v218 = vunpack.c.l.b16 %v58
    %v219 = vunpack.c.l.b16 %v59
    %v220 = vunpack.c.l.b16 %v60
    %v221 = vunpack.c.l.b16 %v61
    %v222 = vunpack.c.l.b16 %v62
    %v223 = vunpack.c.l.b16 %v63
    %v224 = vunpack.c.l.b16 %v64
    %v225 = vunpack.c.l.b16 %v65
    %v226 = vunpack.c.l.b16 %v66
    %v227 = vunpack.c.l.b16 %v67
    %v228 = vunpack.c.l.b16 %v68
    %v229 = vunpack.c.l.b16 %v69
    %v230 = vunpack.c.l.b16 %v70
    %v231 = vunpack.c.l.b16 %v71
    %v232 = vunpack.c.l.b16 %v72
    %v233 = vunpack.c.l.b16 %v73
    %v234 = vunpack.c.l.b16 %v74
    %v235 = vunpack.c.l.b16 %v75
    %v236 = vunpack.c.l.b16 %v76
    %v237 = vunpack.c.l.b16 %v77
    %v238 = vunpack.c.l.b16 %v78
    %v239 = vunpack.c.l.b16 %v79
    %v240 = vunpack.c.l.b16 %v80
    %v241 = vunpack.c.l.b16 %v81
    %v242 = vunpack.c.l.b16 %v82
    %v243 = vunpack.c.l.b16 %v83
    %v244 = vunpack.c.l.b16 %v84
    %v245 = vunpack.c.l.b16 %v85
    %v246 = vunpack.c.l.b16 %v86
    %v247 = vunpack.c.l.b16 %v87
    %v248 = vunpack.c.l.b16 %v88
    %v249 = vunpack.c.l.b16 %v89
    %v250 = vunpack.c.l.b16 %v90
    %v251 = vunpack.c.l.b16 %v91
    %v252 = vunpack.c.l.b16 %v92
    %v253 = vunpack.c.l.b16 %v93
    %v254 = vunpack.c.l.b16 %v94
    %v255 = vunpack.c.l.b16 %v95
    %v256 = vunpack.c.l.b16 %v96
    %v257 = vunpack.c.l.b16 %v97
    %v258 = vunpack.c.l.b16 %v98
    %v259 = vunpack.c.l.b16 %v99
    %v260 = vunpack.c.l.b16 %v100
    %v261 = vunpack.c.l.b16 %v101
    %v262 = vunpack.c.l.b16 %v102
    %v263 = vunpack.c.l.b16 %v103
    %v264 = vunpack.c.l.b16 %v104
    %v265 = vunpack.c.l.b16 %v105
    %v266 = vunpack.c.l.b16 %v106
    %v267 = vunpack.c.l.b16 %v107
    %v268 = vunpack.c.l.b16 %v108
    %v269 = vunpack.c.l.b16 %v109
    %v270 = vunpack.c.l.b16 %v110
    %v271 = vunpack.c.l.b16 %v111
    %v272 = vpack.c.b16 %v199, %v198
    %v273 = vpack.c.b16 %v201, %v200
    %v274 = vpack.c.b16 %v203, %v202
    %v275 = vpack.c.b16 %v205, %v204
    %v276 = vpack.c.b16 %v207, %v206
    %v277 = vpack.c.b16 %v209, %v208
    %v278 = vpack.c.b16 %v211, %v210
    %v279 = vpack.c.b16 %v213, %v212
    %v280 = vpack.c.b16 %v215, %v214
    %v281 = vpack.c.b16 %v217, %v216
    %v282 = vpack.c.b16 %v219, %v218
    %v283 = vpack.c.b16 %v221, %v220
    %v284 = vpack.c.b16 %v223, %v222
    %v285 = vpack.c.b16 %v225, %v224
    %v286 = vpack.c.b16 %v227, %v226
    %v287 = vpack.c.b16 %v229, %v228
    %v288 = vpack.c.b16 %v231, %v230
    %v289 = vpack.c.b16 %v233, %v232
    %v290 = vpack.c.b16 %v235, %v234
    %v291 = vpack.c.b16 %v237, %v236
    %v292 = vpack.c.b16 %v239, %v238
    %v293 = vpack.c.b16 %v241, %v240
    %v294 = vpack.c.b16 %v243, %v242
    %v295 = vpack.c.b16 %v245, %v244
    %v296 = vpack.c.b16 %v247, %v246
    %v297 = vpack.c.b16 %v249, %v248
    %v298 = vpack.c.b16 %v251, %v250
    %v299 = vpack.c.b16 %v253, %v252
    %v300 = vpack.c.b16 %v255, %v254
    %v301 = vpack.c.b16 %v257, %v256
    %v302 = vpack.c.b16 %v259, %v258
    %v303 = vpack.c.b16 %v261, %v260
    %v304 = vpack.c.b16 %v263, %v262
    %v305 = vpack.c.b16 %v265, %v264
    %v306 = vpack.c.b16 %v267, %v266
    %v307 = vpack.c.b16 %v269, %v268
    %v308 = vpack.c.b16 %v271, %v270
    %vm345 = vcmask 621568
    %v347 = vsel %vm345, %v116, 0
    %vm349 = vcmask 1045504
    %v351 = vsel %vm349, %v308, 0
    %353 = vmatprep.subr.bf16.mxu0 0
    %354 = vmatpush1.bf16.msra.mxu0 %v272
    %355 = vmatprep.subr.bf16.mxu0 0
    %356 = vmatpush1.bf16.msra.mxu0 %v273
    %357 = vmatprep.subr.bf16.mxu0 0
    %358 = vmatpush1.bf16.msra.mxu0 %v274
    %359 = vmatprep.subr.bf16.mxu0 0
    %360 = vmatpush1.bf16.msra.mxu0 %v275
    %361 = vmatprep.subr.bf16.mxu0 0
    %362 = vmatpush1.bf16.msra.mxu0 %v276
    %363 = vmatprep.subr.bf16.mxu0 0
    %364 = vmatpush1.bf16.msra.mxu0 %v277
    %365 = vmatprep.subr.bf16.mxu0 0
    %366 = vmatpush1.bf16.msra.mxu0 %v278
    %367 = vmatprep.subr.bf16.mxu0 0
    %368 = vmatpush1.bf16.msra.mxu0 %v279
    %369 = vmatprep.subr.bf16.mxu0 0
    %370 = vmatpush1.bf16.msra.mxu0 %v280
    %371 = vmatprep.subr.bf16.mxu0 0
    %372 = vmatpush1.bf16.msra.mxu0 %v281
    %373 = vmatprep.subr.bf16.mxu0 0
    %374 = vmatpush1.bf16.msra.mxu0 %v282
    %375 = vmatprep.subr.bf16.mxu0 0
    %376 = vmatpush1.bf16.msra.mxu0 %v283
    %377 = vmatprep.subr.bf16.mxu0 0
    %378 = vmatpush1.bf16.msra.mxu0 %v284
    %379 = vmatprep.subr.bf16.mxu0 0
    %380 = vmatpush1.bf16.msra.mxu0 %v285
    %381 = vmatprep.subr.bf16.mxu0 0
    %382 = vmatpush1.bf16.msra.mxu0 %v286
    %383 = vmatprep.subr.bf16.mxu0 0
    %384 = vmatpush1.bf16.msra.mxu0 %v287
    %385 = vmatprep.mubr.bf16.mxu0 %v113
    %386 = vmatmul.mubr.bf16.gmra.mrb[0].mxu0 %v112
    %v387 = vpop.f32.mrb[0].mxu0
    %v388 = vadd.f32 %v122, %v387
    %v389 = vpop.f32.mrb[0].mxu0
    %v390 = vpop.f32.mrb[0].mxu0
    %v391 = vadd.f32 %v122, %v390
    %v392 = vpop.f32.mrb[0].mxu0
    %393 = vdwg.mxu0
    %394 = vmatprep.subr.bf16.mxu0 0
    %395 = vmatpush1.bf16.msra.mxu0 %v288
    %396 = vmatprep.subr.bf16.mxu0 0
    %397 = vmatpush1.bf16.msra.mxu0 %v289
    %398 = vmatprep.subr.bf16.mxu0 0
    %399 = vmatpush1.bf16.msra.mxu0 %v290
    %400 = vmatprep.subr.bf16.mxu0 0
    %401 = vmatpush1.bf16.msra.mxu0 %v291
    %402 = vmatprep.subr.bf16.mxu0 0
    %403 = vmatpush1.bf16.msra.mxu0 %v292
    %404 = vmatprep.subr.bf16.mxu0 0
    %405 = vmatpush1.bf16.msra.mxu0 %v293
    %406 = vmatprep.subr.bf16.mxu0 0
    %407 = vmatpush1.bf16.msra.mxu0 %v294
    %408 = vmatprep.subr.bf16.mxu0 0
    %409 = vmatpush1.bf16.msra.mxu0 %v295
    %410 = vmatprep.subr.bf16.mxu0 0
    %411 = vmatpush1.bf16.msra.mxu0 %v296
    %412 = vmatprep.subr.bf16.mxu0 0
    %413 = vmatpush1.bf16.msra.mxu0 %v297
    %414 = vmatprep.subr.bf16.mxu0 0
    %415 = vmatpush1.bf16.msra.mxu0 %v298
    %416 = vmatprep.subr.bf16.mxu0 0
    %417 = vmatpush1.bf16.msra.mxu0 %v299
    %418 = vmatprep.subr.bf16.mxu0 0
    %419 = vmatpush1.bf16.msra.mxu0 %v300
    %420 = vmatprep.subr.bf16.mxu0 0
    %421 = vmatpush1.bf16.msra.mxu0 %v301
    %422 = vmatprep.subr.bf16.mxu0 0
    %423 = vmatpush1.bf16.msra.mxu0 %v302
    %424 = vmatprep.subr.bf16.mxu0 0
    %425 = vmatpush1.bf16.msra.mxu0 %v303
    %426 = vmatprep.mubr.bf16.mxu0 %v115
    %427 = vmatmul.mubr.bf16.gmra.mrb[0].mxu0 %v114
    %v428 = vpop.f32.mrb[0].mxu0
    %v429 = vadd.f32 %v388, %v428
    %v430 = vpop.f32.mrb[0].mxu0
    %v431 = vpop.f32.mrb[0].mxu0
    %v432 = vadd.f32 %v391, %v431
    %v433 = vpop.f32.mrb[0].mxu0
    %434 = vdwg.mxu0
    %435 = vmatprep.subr.bf16.mxu0 0
    %436 = vmatpush1.bf16.msra.mxu0 %v304
    %437 = vmatprep.subr.bf16.mxu0 0
    %438 = vmatpush1.bf16.msra.mxu0 %v305
    %439 = vmatprep.subr.bf16.mxu0 0
    %440 = vmatpush1.bf16.msra.mxu0 %v306
    %441 = vmatprep.subr.bf16.mxu0 0
    %442 = vmatpush1.bf16.msra.mxu0 %v307
    %443 = vmatprep.subr.bf16.mxu0 0
    %444 = vmatpush1.bf16.msra.mxu0 %v351
    %445 = vmatprep.subr.bf16.mxu0 0
    %446 = vmatpush1.bf16.msra.mxu0 0
    %447 = vmatprep.subr.bf16.mxu0 0
    %448 = vmatpush1.bf16.msra.mxu0 0
    %449 = vmatprep.subr.bf16.mxu0 0
    %450 = vmatpush1.bf16.msra.mxu0 0
    %451 = vmatprep.subr.bf16.mxu0 0
    %452 = vmatpush1.bf16.msra.mxu0 0
    %453 = vmatprep.subr.bf16.mxu0 0
    %454 = vmatpush1.bf16.msra.mxu0 0
    %455 = vmatprep.subr.bf16.mxu0 0
    %456 = vmatpush1.bf16.msra.mxu0 0
    %457 = vmatprep.subr.bf16.mxu0 0
    %458 = vmatpush1.bf16.msra.mxu0 0
    %459 = vmatprep.subr.bf16.mxu0 0
    %460 = vmatpush1.bf16.msra.mxu0 0
    %461 = vmatprep.subr.bf16.mxu0 0
    %462 = vmatpush1.bf16.msra.mxu0 0
    %463 = vmatprep.subr.bf16.mxu0 0
    %464 = vmatpush1.bf16.msra.mxu0 0
    %465 = vmatprep.subr.bf16.mxu0 0
    %466 = vmatpush1.bf16.msra.mxu0 0
    %467 = vmatprep.mubr.bf16.mxu0 0
    %468 = vmatmul.mubr.bf16.gmra.mrb[0].mxu0 %v347
    %v469 = vpop.f32.mrb[0].mxu0
    %v470 = vadd.f32 %v429, %v469
    %v471 = vpop.f32.mrb[0].mxu0
    %v472 = vpop.f32.mrb[0].mxu0
    %v473 = vadd.f32 %v432, %v472
    %v474 = vpop.f32.mrb[0].mxu0
    %475 = vdwg.mxu0
    %v476 = vld [vmem:[%s3] sm:$0xff]
    %v477 = vld [vmem:[%s3 + $0x8] sm:$0xff]
    %v478 = vld [vmem:[%s3 + $0x10] sm:$0xf]
    %v479 = vld [vmem:[%s4] sm:$0xff]
    %v480 = vld [vmem:[%s4 + $0x8] sm:$0xff]
    %v481 = vld [vmem:[%s4 + $0x10] sm:$0xf]
    %v482 = vld [vmem:[%s5] sm:$0x1]
    %484 = vset.pattern.permute.xlu0 0
    %485 = vperm.xlu0 %484, %v479
    %v486 = vpop.permute.xlu0 %485
    %489 = vset.pattern.permute.xlu0 0
    %490 = vperm.xlu0 %489, %v480
    %v491 = vpop.permute.xlu0 %490
    %494 = vset.pattern.permute.xlu0 0
    %495 = vperm.xlu0 %494, %v481
    %v496 = vpop.permute.xlu0 %495
    %v499 = vlaneseq
    %v500 = vshrl.u32 %v499, 7
    %v501 = vsub.s32 0, %v500
    %v502 = vrot.slane %v482, %v501
    %v504 = vmul.f32 %v486, %v502
    %v505 = vmul.f32 %v491, %v502
    %v506 = vmul.f32 %v496, %v502
    %vm507 = vcmask 130048
    %v509 = vsel %vm507, %v476, 0
    %v512 = vsel %vm507, %v477, 0
    %v515 = vsel %vm507, %v478, 0
    %517 = vmatprep.subr.mxu0 0.0
    %518 = vmatpush1.msra.mxu0 %v470
    %519 = vmatprep.subr.mxu0 0.0
    %520 = vmatpush1.msra.mxu0 %v473
    %521 = vmatprep.subr.mxu0 0.0
    %522 = vmatpush1.msra.mxu0 0.0
    %523 = vmatprep.subr.mxu0 0.0
    %524 = vmatpush1.msra.mxu0 0.0
    %525 = vmatprep.subr.mxu0 0.0
    %526 = vmatpush1.msra.mxu0 0.0
    %527 = vmatprep.subr.mxu0 0.0
    %528 = vmatpush1.msra.mxu0 0.0
    %529 = vmatprep.subr.mxu0 0.0
    %530 = vmatpush1.msra.mxu0 0.0
    %531 = vmatprep.subr.mxu0 0.0
    %532 = vmatpush1.msra.mxu0 0.0
    %533 = vmatprep.subr.mxu0 0.0
    %534 = vmatpush1.msra.mxu0 0.0
    %535 = vmatprep.subr.mxu0 0.0
    %536 = vmatpush1.msra.mxu0 0.0
    %537 = vmatprep.subr.mxu0 0.0
    %538 = vmatpush1.msra.mxu0 0.0
    %539 = vmatprep.subr.mxu0 0.0
    %540 = vmatpush1.msra.mxu0 0.0
    %541 = vmatprep.subr.mxu0 0.0
    %542 = vmatpush1.msra.mxu0 0.0
    %543 = vmatprep.subr.mxu0 0.0
    %544 = vmatpush1.msra.mxu0 0.0
    %545 = vmatprep.subr.mxu0 0.0
    %546 = vmatpush1.msra.mxu0 0.0
    %547 = vmatprep.subr.mxu0 0.0
    %548 = vmatpush1.msra.mxu0 0.0
    %549 = vmatprep.subr.mxu0 0.0
    %550 = vmatpush1.msra.mxu0 0.0
    %551 = vmatprep.subr.mxu0 0.0
    %552 = vmatpush1.msra.mxu0 0.0
    %553 = vmatprep.subr.mxu0 0.0
    %554 = vmatpush1.msra.mxu0 0.0
    %555 = vmatprep.subr.mxu0 0.0
    %556 = vmatpush1.msra.mxu0 0.0
    %557 = vmatprep.subr.mxu0 0.0
    %558 = vmatpush1.msra.mxu0 0.0
    %559 = vmatprep.subr.mxu0 0.0
    %560 = vmatpush1.msra.mxu0 0.0
    %561 = vmatprep.subr.mxu0 0.0
    %562 = vmatpush1.msra.mxu0 0.0
    %563 = vmatprep.subr.mxu0 0.0
    %564 = vmatpush1.msra.mxu0 0.0
    %565 = vmatprep.subr.mxu0 0.0
    %566 = vmatpush1.msra.mxu0 0.0
    %567 = vmatprep.subr.mxu0 0.0
    %568 = vmatpush1.msra.mxu0 0.0
    %569 = vmatprep.subr.mxu0 0.0
    %570 = vmatpush1.msra.mxu0 0.0
    %571 = vmatprep.subr.mxu0 0.0
    %572 = vmatpush1.msra.mxu0 0.0
    %573 = vmatprep.subr.mxu0 0.0
    %574 = vmatpush1.msra.mxu0 0.0
    %575 = vmatprep.subr.mxu0 0.0
    %576 = vmatpush1.msra.mxu0 0.0
    %577 = vmatprep.subr.mxu0 0.0
    %578 = vmatpush1.msra.mxu0 0.0
    %579 = vmatprep.subr.mxu0 0.0
    %580 = vmatpush1.msra.mxu0 0.0
    %581 = vmatprep.mubr.f32.mxu0 0.0
    %582 = vmatmul.mubr.f32.gmra.mrb[0].mxu0 %v509
    %v583 = vpop.f32.mrb[0].mxu0
    %v584 = vadd.f32 %v504, %v583
    %v585 = vpop.f32.mrb[0].mxu0
    %586 = vmatprep.mubr.f32.mxu0 0.0
    %587 = vmatmul.mubr.f32.gmra.mrb[0].mxu0 %v512
    %v588 = vpop.f32.mrb[0].mxu0
    %v589 = vadd.f32 %v505, %v588
    %v590 = vpop.f32.mrb[0].mxu0
    %591 = vmatprep.mubr.f32.mxu0 0.0
    %592 = vmatmul.mubr.f32.gmra.mrb[0].mxu0 %v515
    %v593 = vpop.f32.mrb[0].mxu0
    %v594 = vadd.f32 %v506, %v593
    %v595 = vpop.f32.mrb[0].mxu0
    %596 = vdwg.mxu0
    %v597 = vld [vmem:[%s6] sm:$0xff]
    %v598 = vld [vmem:[%s6 + $0x8] sm:$0xff]
    %v599 = vld [vmem:[%s6 + $0x10] sm:$0xf]
    %v600 = vadd.f32 %v584, %v597
    %v601 = vadd.f32 %v589, %v598
    %v602 = vadd.f32 %v594, %v599
    %vm603 = vcmask 261120
    %604 = vst.msk [vmem:[#allocation2] sm:$0xff] %vm603, %v600
    %605 = vst.msk [vmem:[#allocation2 + $0x8] sm:$0xff] %vm603, %v601
    %vm606 = vcmask 257024
    %607 = vst.msk [vmem:[#allocation2 + $0x10] sm:$0xf] %vm606, %v602
    // Predicated region
    $region30: #{tpu_custom_call.1} parent=1 // pred_check
      _
    $region31: #{tpu_custom_call.1} parent=1 // pred_check_branch
      %609 = sbr.rel (0) target = $region33
    $region32: #{tpu_custom_call.1} parent=1 // pred_region
      %s611 = ssub.s32 384, 384
      %612 = vsyncadd [#allocation3], %s611
      %s613 = sshll.u32 [#allocation2], 4
      %s614 = int_to_ptr.vmem [resolvable:$true] %s613
      %619 = dma.vmem_to_hbm [thread:$0]  %s614, 384, %s7, [#allocation3], 128, 128, 8
    $region33: #{tpu_custom_call.1} parent=1 // pred_fallthru
      _
    // Predicated region
    $region34: #{tpu_custom_call.1} parent=1 // pred_check
      _
    $region35: #{tpu_custom_call.1} parent=1 // pred_check_branch
      %621 = sbr.rel (0) target = $region37
    $region36: #{tpu_custom_call.1} parent=1 // pred_region
      %622 = dma.done [#allocation3], 384
    $region37: #{tpu_custom_call.1} parent=1 // pred_fallthru
      _
    %623 = vsyncpa [#allocation3], 1

</llo_original>
